<compile_context>
chip_gen: v5e
topology: v5e:2x2
jax: 0.10.0
libtpu: 0.0.40
codegen_flags: <defaults>
</compile_context>

<pallas_src>
import jax
import jax.numpy as jnp
import numpy as np
from jax.experimental import pallas as pl
from jax.experimental.pallas import tpu as pltpu


_VMEM_LIMIT_BYTES = 48 * 1024 * 1024   # explicit scoped-VMEM limit (safe on v5e/v6e/v7x)
_VMEM_TILE_BUDGET = 32 * 1024 * 1024   # what the tile picker may consume (headroom kept)


def _round_up(x, m):
    return ((x + m - 1) // m) * m


def _pick_tile_n(N, L, D, H, F1):
    """Batch tile: as large as the VMEM budget allows, >=2 tiles for megacore on big N."""
    n8 = _round_up(max(int(N), 1), 8)
    # rough f32 bytes per batch row resident in VMEM:
    #   x double-buffer (+reshape headroom) + xw_all slab + gate/state temps + head temps
    bytes_per_row = 4 * (3 * L * D + 4 * L * H + 24 * H + 4 * F1)
    vmem_rows = max(128, (_VMEM_TILE_BUDGET // bytes_per_row) // 128 * 128)
    if n8 <= 256:
        return n8                                   # single tile, grid = 1 (latency path)
    # multi-tile: lane-dense (1, tile_n) output blocks need tile_n % 128 == 0,
    # and >= 2 grid steps lets v7x shard the batch across both TensorCores.
    n_tiles = max(2, pl.cdiv(n8, 1024))
    tile = _round_up(pl.cdiv(n8, n_tiles), 128)
    return int(min(tile, 1024, vmem_rows))


def _lstm_mlp_kernel(x_ref, wih_ref, whh_ref, b_ref,
                     w1_ref, b1_ref, w2_ref, b2_ref, out_ref):
    # x_ref:   (L, TILE_N, D)  time-major input block (batch padded to TILE_N)
    # wih_ref: (D, 4H)         pre-transposed, gate order [i, f, o, g]
    # whh_ref: (H, 4H)         pre-transposed, gate order [i, f, o, g]
    # b_ref:   (1, 4H)         b_ih + b_hh, reordered
    # w1_ref:  (H, 150), b1_ref: (1, 150)
    # w2_ref:  (1, 150)  (row vector), b2_ref: (1, 1)
    # out_ref: (1, TILE_N)     lane-dense output row
    L, TN, D = x_ref.shape
    H = whh_ref.shape[0]

    wih = wih_ref[...]                 # (D, 4H)   no in-kernel transposes
    whh = whh_ref[...]                 # (H, 4H)   loop-invariant MXU RHS
    b = b_ref[...]                     # (1, 4H)

    # Input contribution for all timesteps in one MXU matmul.
    # TILE_N % 8 == 0 -> merging the leading dims is layout-preserving.
    x_all = x_ref[...].reshape(L * TN, D)
    xw_all = jnp.dot(x_all, wih, preferred_element_type=jnp.float32) + b   # (L*TN, 4H)

    h = jnp.zeros((TN, H), jnp.float32)
    c = jnp.zeros((TN, H), jnp.float32)
    hsum = jnp.zeros((TN, H), jnp.float32)

    # Fully unrolled recurrence: static trip count, static sublane-aligned slices,
    # gives the LLO scheduler visibility to overlap consecutive steps.
    for t in range(L):
        xw_t = xw_all[t * TN:(t + 1) * TN, :]                       # (TN, 4H) static slice
        gates = xw_t + jnp.dot(h, whh, preferred_element_type=jnp.float32)
        sig = jax.nn.sigmoid(gates[:, :3 * H])                      # one EUP call: i, f, o
        g = jnp.tanh(gates[:, 3 * H:])                              # one EUP call: g
        i_g = sig[:, 0 * H:1 * H]
        f_g = sig[:, 1 * H:2 * H]
        o_g = sig[:, 2 * H:3 * H]
        c = f_g * c + i_g * g
        h = o_g * jnp.tanh(c)
        hsum = hsum + h

    # sentences = sum_t h_t -> Linear1 -> ReLU -> (VPU·reduce head) -> sigmoid
    z1 = jnp.dot(hsum, w1_ref[...], preferred_element_type=jnp.float32) + b1_ref[...]
    z1 = jnp.maximum(z1, 0.0)                                        # (TN, 150)
    # width-1 head as VPU multiply + XLU lane reduce instead of a (150,1) MXU matmul
    z2 = jnp.sum(z1 * w2_ref[...], axis=-1, keepdims=True) + b2_ref[...]   # (TN, 1)
    # tiny XLU transpose -> lane-dense (1, TN) store (unmasked vst, contiguous writeback)
    out_ref[...] = jax.nn.sigmoid(z2).T


def base_model_forward(data, params, *, tile_n=None):
    """data: (N, L, D) float32 -> squeeze(sigmoid(...)) matching the PyTorch forward."""
    N, L, D = data.shape
    H = params["whh"].shape[1]
    F1 = params["w1"].shape[0]

    if tile_n is None:
        tile_n = _pick_tile_n(N, L, D, H, F1)
    assert tile_n % 8 == 0, "tile_n must be sublane-aligned (multiple of 8)"
    n_pad = _round_up(N, tile_n)
    if n_pad != tile_n:
        # multi-tile grid: lane-dense (1, tile_n) output blocks must be 128-lane aligned
        assert tile_n % 128 == 0, "tile_n must be a multiple of 128 when batch spans multiple tiles"

    # Time-major layout + batch pad (pad rows are computed then discarded after the call).
    x = jnp.transpose(data, (1, 0, 2))                               # (L, N, D)
    if n_pad != N:
        x = jnp.pad(x, ((0, 0), (0, n_pad - N), (0, 0)))

    # Trace-time weight prep: gate reorder [i,f,g,o]->[i,f,o,g], transposes, bias pre-sum.
    perm = jnp.concatenate([jnp.arange(0, 2 * H),
                            jnp.arange(3 * H, 4 * H),
                            jnp.arange(2 * H, 3 * H)])
    wih_t = params["wih"][perm].T                                     # (D, 4H)
    whh_t = params["whh"][perm].T                                     # (H, 4H)
    b = (params["bih"] + params["bhh"])[perm].reshape(1, 4 * H)       # (1, 4H)
    w1_t = params["w1"].T                                             # (H, 150)
    b1 = params["b1"].reshape(1, F1)                                  # (1, 150)
    w2_row = params["w2"].reshape(1, F1)                              # (1, 150) row
    b2 = params["b2"].reshape(1, 1)                                   # (1, 1)

    out = pl.pallas_call(
        _lstm_mlp_kernel,
        out_shape=jax.ShapeDtypeStruct((1, n_pad), jnp.float32),      # lane-dense output
        grid_spec=pltpu.PrefetchScalarGridSpec(
            num_scalar_prefetch=0,
            grid=(n_pad // tile_n,),
            in_specs=[
                pl.BlockSpec((L, tile_n, D), lambda i: (0, i, 0)),    # batch-tiled input
                pl.BlockSpec((D, 4 * H), lambda i: (0, 0)),           # weights stay resident
                pl.BlockSpec((H, 4 * H), lambda i: (0, 0)),
                pl.BlockSpec((1, 4 * H), lambda i: (0, 0)),
                pl.BlockSpec((H, F1), lambda i: (0, 0)),
                pl.BlockSpec((1, F1), lambda i: (0, 0)),
                pl.BlockSpec((1, F1), lambda i: (0, 0)),
                pl.BlockSpec((1, 1), lambda i: (0, 0)),
            ],
            out_specs=pl.BlockSpec((1, tile_n), lambda i: (0, i)),
        ),
        compiler_params=pltpu.CompilerParams(
            dimension_semantics=("parallel",),                        # megacore-shardable on v7x
            vmem_limit_bytes=_VMEM_LIMIT_BYTES,                       # big tiles safe on v5e too
        ),
    )(x, wih_t, whh_t, b, w1_t, b1, w2_row, b2)

    return jnp.squeeze(out[0, :N])    # torch.squeeze of (N, 1) -> (N,)


def init_params(key, hidden_size, embed_dim):
    """Deterministic parameter init (PyTorch-style uniform ranges, PyTorch layouts)."""
    ks = jax.random.split(key, 8)
    k_lstm = 1.0 / np.sqrt(hidden_size)
    k_l1 = 1.0 / np.sqrt(hidden_size)
    k_l2 = 1.0 / np.sqrt(150)
    u = lambda k, shape, lim: jax.random.uniform(k, shape, jnp.float32, -lim, lim)
    return {
        "wih": u(ks[0], (4 * hidden_size, embed_dim), k_lstm),
        "whh": u(ks[1], (4 * hidden_size, hidden_size), k_lstm),
        "bih": u(ks[2], (4 * hidden_size,), k_lstm),
        "bhh": u(ks[3], (4 * hidden_size,), k_lstm),
        "w1":  u(ks[4], (150, hidden_size), k_l1),
        "b1":  u(ks[5], (150,), k_l1),
        "w2":  u(ks[6], (1, 150), k_l2),
        "b2":  u(ks[7], (1,), k_l2),
    }


def reference_forward(data, params):
    """Pure-JAX reference mirroring the PyTorch module (original [i,f,g,o] layout)."""
    N, L, D = data.shape
    H = params["whh"].shape[1]
    wih_t = params["wih"].T
    whh_t = params["whh"].T
    b = params["bih"] + params["bhh"]

    def step(carry, x_t):
        h, c = carry
        gates = x_t @ wih_t + h @ whh_t + b
        i = jax.nn.sigmoid(gates[:, 0 * H:1 * H])
        f = jax.nn.sigmoid(gates[:, 1 * H:2 * H])
        g = jnp.tanh(gates[:, 2 * H:3 * H])
        o = jax.nn.sigmoid(gates[:, 3 * H:4 * H])
        c = f * c + i * g
        h = o * jnp.tanh(c)
        return (h, c), h

    h0 = jnp.zeros((N, H), jnp.float32)
    (_, _), hs = jax.lax.scan(step, (h0, h0), jnp.transpose(data, (1, 0, 2)))
    sentences = jnp.sum(hs, axis=0)                                   # (N, H)
    z1 = jnp.maximum(sentences @ params["w1"].T + params["b1"], 0.0)
    z2 = z1 @ params["w2"].T + params["b2"]
    return jnp.squeeze(jax.nn.sigmoid(z2))


if __name__ == "__main__":
    # Small shapes consistent with the module: (N, L, D) = (2, 8, 32), hidden = 32.
    N, L, D, H = 2, 8, 32, 32
    key = jax.random.PRNGKey(0)
    k_data, k_params, k_data2 = jax.random.split(key, 3)
    params = init_params(k_params, hidden_size=H, embed_dim=D)

    data = jax.random.normal(k_data, (N, L, D), dtype=jnp.float32)
    out = jax.block_until_ready(base_model_forward(data, params))
    ref = jax.block_until_ready(reference_forward(data, params))
    assert out.shape == (N,), out.shape
    np.testing.assert_allclose(np.asarray(out), np.asarray(ref), rtol=1e-5, atol=1e-5)

    # Also exercise the multi-tile batch grid (ragged batch, padding, lane-dense output).
    N2 = 300
    data2 = jax.random.normal(k_data2, (N2, L, D), dtype=jnp.float32)
    out2 = jax.block_until_ready(base_model_forward(data2, params, tile_n=128))
    ref2 = jax.block_until_ready(reference_forward(data2, params))
    assert out2.shape == (N2,), out2.shape
    np.testing.assert_allclose(np.asarray(out2), np.asarray(ref2), rtol=1e-5, atol=1e-5)

    print("KERNEL_OK")
</pallas_src>

<mosaic_0001>
module attributes {stable_mosaic.version = 11 : i64} {
  func.func @_lstm_mlp_kernel(%arg0: i32, %arg1: memref<8x8x32xf32, #tpu.memory_space<vmem>>, %arg2: memref<32x128xf32, #tpu.memory_space<vmem>>, %arg3: memref<32x128xf32, #tpu.memory_space<vmem>>, %arg4: memref<1x128xf32, #tpu.memory_space<vmem>>, %arg5: memref<32x150xf32, #tpu.memory_space<vmem>>, %arg6: memref<1x150xf32, #tpu.memory_space<vmem>>, %arg7: memref<1x150xf32, #tpu.memory_space<vmem>>, %arg8: memref<1x1xf32, #tpu.memory_space<vmem>>, %arg9: memref<1x8xf32, #tpu.memory_space<vmem>>) attributes {dimension_semantics = [#tpu.dimension_semantics<parallel>], iteration_bounds = array<i64: 1>, scalar_prefetch = 0 : i64, scratch_operands = 0 : i64, tpu.core_type = #tpu.core_type<tc>, window_params = [{transform_indices = @transform_0, window_bounds = array<i64: 8, 8, 32>}, {pipeline_mode = #tpu.pipeline_mode<synchronous>, transform_indices = @transform_1, window_bounds = array<i64: 32, 128>}, {pipeline_mode = #tpu.pipeline_mode<synchronous>, transform_indices = @transform_2, window_bounds = array<i64: 32, 128>}, {pipeline_mode = #tpu.pipeline_mode<synchronous>, transform_indices = @transform_3, window_bounds = array<i64: 1, 128>}, {pipeline_mode = #tpu.pipeline_mode<synchronous>, transform_indices = @transform_4, window_bounds = array<i64: 32, 150>}, {pipeline_mode = #tpu.pipeline_mode<synchronous>, transform_indices = @transform_5, window_bounds = array<i64: 1, 150>}, {pipeline_mode = #tpu.pipeline_mode<synchronous>, transform_indices = @transform_6, window_bounds = array<i64: 1, 150>}, {pipeline_mode = #tpu.pipeline_mode<synchronous>, transform_indices = @transform_7, window_bounds = array<i64: 1, 1>}, {transform_indices = @transform_8, window_bounds = array<i64: 1, 8>}]} {
    %c0 = arith.constant 0 : index
    %c0_0 = arith.constant 0 : index
    %0 = vector.load %arg2[%c0, %c0_0] : memref<32x128xf32, #tpu.memory_space<vmem>>, vector<32x128xf32>
    %c0_1 = arith.constant 0 : index
    %c0_2 = arith.constant 0 : index
    %1 = vector.load %arg3[%c0_1, %c0_2] : memref<32x128xf32, #tpu.memory_space<vmem>>, vector<32x128xf32>
    %c0_3 = arith.constant 0 : index
    %c0_4 = arith.constant 0 : index
    %2 = vector.load %arg4[%c0_3, %c0_4] : memref<1x128xf32, #tpu.memory_space<vmem>>, vector<1x128xf32>
    %c0_5 = arith.constant 0 : index
    %c0_6 = arith.constant 0 : index
    %c0_7 = arith.constant 0 : index
    %3 = vector.load %arg1[%c0_5, %c0_6, %c0_7] : memref<8x8x32xf32, #tpu.memory_space<vmem>>, vector<8x8x32xf32>
    %4 = vector.shape_cast %3 : vector<8x8x32xf32> to vector<64x32xf32>
    %cst = arith.constant dense<0.000000e+00> : vector<64x128xf32>
    %5 = tpu.matmul %4, %0, %cst {dimension_numbers = #tpu.dot_dimension_numbers<[1], [0], [0], [1], [0, 0, 1, 1], [], []>} : vector<64x32xf32>, vector<32x128xf32>, vector<64x128xf32> -> vector<64x128xf32>
    %6 = vector.broadcast %2 : vector<1x128xf32> to vector<64x128xf32>
    %7 = arith.addf %5, %6 : vector<64x128xf32>
    %cst_8 = arith.constant 0.000000e+00 : f32
    %8 = vector.broadcast %cst_8 : f32 to vector<8x32xf32>
    %cst_9 = arith.constant 0.000000e+00 : f32
    %9 = vector.broadcast %cst_9 : f32 to vector<8x32xf32>
    %cst_10 = arith.constant 0.000000e+00 : f32
    %10 = vector.broadcast %cst_10 : f32 to vector<8x32xf32>
    %11 = vector.extract_strided_slice %7 {offsets = [0, 0], sizes = [8, 128], strides = [1, 1]} : vector<64x128xf32> to vector<8x128xf32>
    %cst_11 = arith.constant dense<0.000000e+00> : vector<8x128xf32>
    %12 = tpu.matmul %8, %1, %cst_11 {dimension_numbers = #tpu.dot_dimension_numbers<[1], [0], [0], [1], [0, 0, 1, 1], [], []>} : vector<8x32xf32>, vector<32x128xf32>, vector<8x128xf32> -> vector<8x128xf32>
    %13 = arith.addf %11, %12 : vector<8x128xf32>
    %14 = vector.extract_strided_slice %13 {offsets = [0, 0], sizes = [8, 96], strides = [1, 1]} : vector<8x128xf32> to vector<8x96xf32>
    %15 = arith.negf %14 : vector<8x96xf32>
    %16 = math.exp %15 : vector<8x96xf32>
    %cst_12 = arith.constant 1.000000e+00 : f32
    %17 = vector.broadcast %cst_12 : f32 to vector<8x96xf32>
    %18 = arith.addf %17, %16 : vector<8x96xf32>
    %19 = arith.divf %17, %18 : vector<8x96xf32>
    %20 = vector.extract_strided_slice %13 {offsets = [0, 96], sizes = [8, 32], strides = [1, 1]} : vector<8x128xf32> to vector<8x32xf32>
    %21 = math.tanh %20 : vector<8x32xf32>
    %22 = vector.extract_strided_slice %19 {offsets = [0, 0], sizes = [8, 32], strides = [1, 1]} : vector<8x96xf32> to vector<8x32xf32>
    %23 = vector.extract_strided_slice %19 {offsets = [0, 32], sizes = [8, 32], strides = [1, 1]} : vector<8x96xf32> to vector<8x32xf32>
    %24 = vector.extract_strided_slice %19 {offsets = [0, 64], sizes = [8, 32], strides = [1, 1]} : vector<8x96xf32> to vector<8x32xf32>
    %25 = arith.mulf %23, %9 : vector<8x32xf32>
    %26 = arith.mulf %22, %21 : vector<8x32xf32>
    %27 = arith.addf %25, %26 : vector<8x32xf32>
    %28 = math.tanh %27 : vector<8x32xf32>
    %29 = arith.mulf %24, %28 : vector<8x32xf32>
    %30 = arith.addf %10, %29 : vector<8x32xf32>
    %31 = vector.extract_strided_slice %7 {offsets = [8, 0], sizes = [8, 128], strides = [1, 1]} : vector<64x128xf32> to vector<8x128xf32>
    %cst_13 = arith.constant dense<0.000000e+00> : vector<8x128xf32>
    %32 = tpu.matmul %29, %1, %cst_13 {dimension_numbers = #tpu.dot_dimension_numbers<[1], [0], [0], [1], [0, 0, 1, 1], [], []>} : vector<8x32xf32>, vector<32x128xf32>, vector<8x128xf32> -> vector<8x128xf32>
    %33 = arith.addf %31, %32 : vector<8x128xf32>
    %34 = vector.extract_strided_slice %33 {offsets = [0, 0], sizes = [8, 96], strides = [1, 1]} : vector<8x128xf32> to vector<8x96xf32>
    %35 = arith.negf %34 : vector<8x96xf32>
    %36 = math.exp %35 : vector<8x96xf32>
    %cst_14 = arith.constant 1.000000e+00 : f32
    %37 = vector.broadcast %cst_14 : f32 to vector<8x96xf32>
    %38 = arith.addf %37, %36 : vector<8x96xf32>
    %39 = arith.divf %37, %38 : vector<8x96xf32>
    %40 = vector.extract_strided_slice %33 {offsets = [0, 96], sizes = [8, 32], strides = [1, 1]} : vector<8x128xf32> to vector<8x32xf32>
    %41 = math.tanh %40 : vector<8x32xf32>
    %42 = vector.extract_strided_slice %39 {offsets = [0, 0], sizes = [8, 32], strides = [1, 1]} : vector<8x96xf32> to vector<8x32xf32>
    %43 = vector.extract_strided_slice %39 {offsets = [0, 32], sizes = [8, 32], strides = [1, 1]} : vector<8x96xf32> to vector<8x32xf32>
    %44 = vector.extract_strided_slice %39 {offsets = [0, 64], sizes = [8, 32], strides = [1, 1]} : vector<8x96xf32> to vector<8x32xf32>
    %45 = arith.mulf %43, %27 : vector<8x32xf32>
    %46 = arith.mulf %42, %41 : vector<8x32xf32>
    %47 = arith.addf %45, %46 : vector<8x32xf32>
    %48 = math.tanh %47 : vector<8x32xf32>
    %49 = arith.mulf %44, %48 : vector<8x32xf32>
    %50 = arith.addf %30, %49 : vector<8x32xf32>
    %51 = vector.extract_strided_slice %7 {offsets = [16, 0], sizes = [8, 128], strides = [1, 1]} : vector<64x128xf32> to vector<8x128xf32>
    %cst_15 = arith.constant dense<0.000000e+00> : vector<8x128xf32>
    %52 = tpu.matmul %49, %1, %cst_15 {dimension_numbers = #tpu.dot_dimension_numbers<[1], [0], [0], [1], [0, 0, 1, 1], [], []>} : vector<8x32xf32>, vector<32x128xf32>, vector<8x128xf32> -> vector<8x128xf32>
    %53 = arith.addf %51, %52 : vector<8x128xf32>
    %54 = vector.extract_strided_slice %53 {offsets = [0, 0], sizes = [8, 96], strides = [1, 1]} : vector<8x128xf32> to vector<8x96xf32>
    %55 = arith.negf %54 : vector<8x96xf32>
    %56 = math.exp %55 : vector<8x96xf32>
    %cst_16 = arith.constant 1.000000e+00 : f32
    %57 = vector.broadcast %cst_16 : f32 to vector<8x96xf32>
    %58 = arith.addf %57, %56 : vector<8x96xf32>
    %59 = arith.divf %57, %58 : vector<8x96xf32>
    %60 = vector.extract_strided_slice %53 {offsets = [0, 96], sizes = [8, 32], strides = [1, 1]} : vector<8x128xf32> to vector<8x32xf32>
    %61 = math.tanh %60 : vector<8x32xf32>
    %62 = vector.extract_strided_slice %59 {offsets = [0, 0], sizes = [8, 32], strides = [1, 1]} : vector<8x96xf32> to vector<8x32xf32>
    %63 = vector.extract_strided_slice %59 {offsets = [0, 32], sizes = [8, 32], strides = [1, 1]} : vector<8x96xf32> to vector<8x32xf32>
    %64 = vector.extract_strided_slice %59 {offsets = [0, 64], sizes = [8, 32], strides = [1, 1]} : vector<8x96xf32> to vector<8x32xf32>
    %65 = arith.mulf %63, %47 : vector<8x32xf32>
    %66 = arith.mulf %62, %61 : vector<8x32xf32>
    %67 = arith.addf %65, %66 : vector<8x32xf32>
    %68 = math.tanh %67 : vector<8x32xf32>
    %69 = arith.mulf %64, %68 : vector<8x32xf32>
    %70 = arith.addf %50, %69 : vector<8x32xf32>
    %71 = vector.extract_strided_slice %7 {offsets = [24, 0], sizes = [8, 128], strides = [1, 1]} : vector<64x128xf32> to vector<8x128xf32>
    %cst_17 = arith.constant dense<0.000000e+00> : vector<8x128xf32>
    %72 = tpu.matmul %69, %1, %cst_17 {dimension_numbers = #tpu.dot_dimension_numbers<[1], [0], [0], [1], [0, 0, 1, 1], [], []>} : vector<8x32xf32>, vector<32x128xf32>, vector<8x128xf32> -> vector<8x128xf32>
    %73 = arith.addf %71, %72 : vector<8x128xf32>
    %74 = vector.extract_strided_slice %73 {offsets = [0, 0], sizes = [8, 96], strides = [1, 1]} : vector<8x128xf32> to vector<8x96xf32>
    %75 = arith.negf %74 : vector<8x96xf32>
    %76 = math.exp %75 : vector<8x96xf32>
    %cst_18 = arith.constant 1.000000e+00 : f32
    %77 = vector.broadcast %cst_18 : f32 to vector<8x96xf32>
    %78 = arith.addf %77, %76 : vector<8x96xf32>
    %79 = arith.divf %77, %78 : vector<8x96xf32>
    %80 = vector.extract_strided_slice %73 {offsets = [0, 96], sizes = [8, 32], strides = [1, 1]} : vector<8x128xf32> to vector<8x32xf32>
    %81 = math.tanh %80 : vector<8x32xf32>
    %82 = vector.extract_strided_slice %79 {offsets = [0, 0], sizes = [8, 32], strides = [1, 1]} : vector<8x96xf32> to vector<8x32xf32>
    %83 = vector.extract_strided_slice %79 {offsets = [0, 32], sizes = [8, 32], strides = [1, 1]} : vector<8x96xf32> to vector<8x32xf32>
    %84 = vector.extract_strided_slice %79 {offsets = [0, 64], sizes = [8, 32], strides = [1, 1]} : vector<8x96xf32> to vector<8x32xf32>
    %85 = arith.mulf %83, %67 : vector<8x32xf32>
    %86 = arith.mulf %82, %81 : vector<8x32xf32>
    %87 = arith.addf %85, %86 : vector<8x32xf32>
    %88 = math.tanh %87 : vector<8x32xf32>
    %89 = arith.mulf %84, %88 : vector<8x32xf32>
    %90 = arith.addf %70, %89 : vector<8x32xf32>
    %91 = vector.extract_strided_slice %7 {offsets = [32, 0], sizes = [8, 128], strides = [1, 1]} : vector<64x128xf32> to vector<8x128xf32>
    %cst_19 = arith.constant dense<0.000000e+00> : vector<8x128xf32>
    %92 = tpu.matmul %89, %1, %cst_19 {dimension_numbers = #tpu.dot_dimension_numbers<[1], [0], [0], [1], [0, 0, 1, 1], [], []>} : vector<8x32xf32>, vector<32x128xf32>, vector<8x128xf32> -> vector<8x128xf32>
    %93 = arith.addf %91, %92 : vector<8x128xf32>
    %94 = vector.extract_strided_slice %93 {offsets = [0, 0], sizes = [8, 96], strides = [1, 1]} : vector<8x128xf32> to vector<8x96xf32>
    %95 = arith.negf %94 : vector<8x96xf32>
    %96 = math.exp %95 : vector<8x96xf32>
    %cst_20 = arith.constant 1.000000e+00 : f32
    %97 = vector.broadcast %cst_20 : f32 to vector<8x96xf32>
    %98 = arith.addf %97, %96 : vector<8x96xf32>
    %99 = arith.divf %97, %98 : vector<8x96xf32>
    %100 = vector.extract_strided_slice %93 {offsets = [0, 96], sizes = [8, 32], strides = [1, 1]} : vector<8x128xf32> to vector<8x32xf32>
    %101 = math.tanh %100 : vector<8x32xf32>
    %102 = vector.extract_strided_slice %99 {offsets = [0, 0], sizes = [8, 32], strides = [1, 1]} : vector<8x96xf32> to vector<8x32xf32>
    %103 = vector.extract_strided_slice %99 {offsets = [0, 32], sizes = [8, 32], strides = [1, 1]} : vector<8x96xf32> to vector<8x32xf32>
    %104 = vector.extract_strided_slice %99 {offsets = [0, 64], sizes = [8, 32], strides = [1, 1]} : vector<8x96xf32> to vector<8x32xf32>
    %105 = arith.mulf %103, %87 : vector<8x32xf32>
    %106 = arith.mulf %102, %101 : vector<8x32xf32>
    %107 = arith.addf %105, %106 : vector<8x32xf32>
    %108 = math.tanh %107 : vector<8x32xf32>
    %109 = arith.mulf %104, %108 : vector<8x32xf32>
    %110 = arith.addf %90, %109 : vector<8x32xf32>
    %111 = vector.extract_strided_slice %7 {offsets = [40, 0], sizes = [8, 128], strides = [1, 1]} : vector<64x128xf32> to vector<8x128xf32>
    %cst_21 = arith.constant dense<0.000000e+00> : vector<8x128xf32>
    %112 = tpu.matmul %109, %1, %cst_21 {dimension_numbers = #tpu.dot_dimension_numbers<[1], [0], [0], [1], [0, 0, 1, 1], [], []>} : vector<8x32xf32>, vector<32x128xf32>, vector<8x128xf32> -> vector<8x128xf32>
    %113 = arith.addf %111, %112 : vector<8x128xf32>
    %114 = vector.extract_strided_slice %113 {offsets = [0, 0], sizes = [8, 96], strides = [1, 1]} : vector<8x128xf32> to vector<8x96xf32>
    %115 = arith.negf %114 : vector<8x96xf32>
    %116 = math.exp %115 : vector<8x96xf32>
    %cst_22 = arith.constant 1.000000e+00 : f32
    %117 = vector.broadcast %cst_22 : f32 to vector<8x96xf32>
    %118 = arith.addf %117, %116 : vector<8x96xf32>
    %119 = arith.divf %117, %118 : vector<8x96xf32>
    %120 = vector.extract_strided_slice %113 {offsets = [0, 96], sizes = [8, 32], strides = [1, 1]} : vector<8x128xf32> to vector<8x32xf32>
    %121 = math.tanh %120 : vector<8x32xf32>
    %122 = vector.extract_strided_slice %119 {offsets = [0, 0], sizes = [8, 32], strides = [1, 1]} : vector<8x96xf32> to vector<8x32xf32>
    %123 = vector.extract_strided_slice %119 {offsets = [0, 32], sizes = [8, 32], strides = [1, 1]} : vector<8x96xf32> to vector<8x32xf32>
    %124 = vector.extract_strided_slice %119 {offsets = [0, 64], sizes = [8, 32], strides = [1, 1]} : vector<8x96xf32> to vector<8x32xf32>
    %125 = arith.mulf %123, %107 : vector<8x32xf32>
    %126 = arith.mulf %122, %121 : vector<8x32xf32>
    %127 = arith.addf %125, %126 : vector<8x32xf32>
    %128 = math.tanh %127 : vector<8x32xf32>
    %129 = arith.mulf %124, %128 : vector<8x32xf32>
    %130 = arith.addf %110, %129 : vector<8x32xf32>
    %131 = vector.extract_strided_slice %7 {offsets = [48, 0], sizes = [8, 128], strides = [1, 1]} : vector<64x128xf32> to vector<8x128xf32>
    %cst_23 = arith.constant dense<0.000000e+00> : vector<8x128xf32>
    %132 = tpu.matmul %129, %1, %cst_23 {dimension_numbers = #tpu.dot_dimension_numbers<[1], [0], [0], [1], [0, 0, 1, 1], [], []>} : vector<8x32xf32>, vector<32x128xf32>, vector<8x128xf32> -> vector<8x128xf32>
    %133 = arith.addf %131, %132 : vector<8x128xf32>
    %134 = vector.extract_strided_slice %133 {offsets = [0, 0], sizes = [8, 96], strides = [1, 1]} : vector<8x128xf32> to vector<8x96xf32>
    %135 = arith.negf %134 : vector<8x96xf32>
    %136 = math.exp %135 : vector<8x96xf32>
    %cst_24 = arith.constant 1.000000e+00 : f32
    %137 = vector.broadcast %cst_24 : f32 to vector<8x96xf32>
    %138 = arith.addf %137, %136 : vector<8x96xf32>
    %139 = arith.divf %137, %138 : vector<8x96xf32>
    %140 = vector.extract_strided_slice %133 {offsets = [0, 96], sizes = [8, 32], strides = [1, 1]} : vector<8x128xf32> to vector<8x32xf32>
    %141 = math.tanh %140 : vector<8x32xf32>
    %142 = vector.extract_strided_slice %139 {offsets = [0, 0], sizes = [8, 32], strides = [1, 1]} : vector<8x96xf32> to vector<8x32xf32>
    %143 = vector.extract_strided_slice %139 {offsets = [0, 32], sizes = [8, 32], strides = [1, 1]} : vector<8x96xf32> to vector<8x32xf32>
    %144 = vector.extract_strided_slice %139 {offsets = [0, 64], sizes = [8, 32], strides = [1, 1]} : vector<8x96xf32> to vector<8x32xf32>
    %145 = arith.mulf %143, %127 : vector<8x32xf32>
    %146 = arith.mulf %142, %141 : vector<8x32xf32>
    %147 = arith.addf %145, %146 : vector<8x32xf32>
    %148 = math.tanh %147 : vector<8x32xf32>
    %149 = arith.mulf %144, %148 : vector<8x32xf32>
    %150 = arith.addf %130, %149 : vector<8x32xf32>
    %151 = vector.extract_strided_slice %7 {offsets = [56, 0], sizes = [8, 128], strides = [1, 1]} : vector<64x128xf32> to vector<8x128xf32>
    %cst_25 = arith.constant dense<0.000000e+00> : vector<8x128xf32>
    %152 = tpu.matmul %149, %1, %cst_25 {dimension_numbers = #tpu.dot_dimension_numbers<[1], [0], [0], [1], [0, 0, 1, 1], [], []>} : vector<8x32xf32>, vector<32x128xf32>, vector<8x128xf32> -> vector<8x128xf32>
    %153 = arith.addf %151, %152 : vector<8x128xf32>
    %154 = vector.extract_strided_slice %153 {offsets = [0, 0], sizes = [8, 96], strides = [1, 1]} : vector<8x128xf32> to vector<8x96xf32>
    %155 = arith.negf %154 : vector<8x96xf32>
    %156 = math.exp %155 : vector<8x96xf32>
    %cst_26 = arith.constant 1.000000e+00 : f32
    %157 = vector.broadcast %cst_26 : f32 to vector<8x96xf32>
    %158 = arith.addf %157, %156 : vector<8x96xf32>
    %159 = arith.divf %157, %158 : vector<8x96xf32>
    %160 = vector.extract_strided_slice %153 {offsets = [0, 96], sizes = [8, 32], strides = [1, 1]} : vector<8x128xf32> to vector<8x32xf32>
    %161 = math.tanh %160 : vector<8x32xf32>
    %162 = vector.extract_strided_slice %159 {offsets = [0, 0], sizes = [8, 32], strides = [1, 1]} : vector<8x96xf32> to vector<8x32xf32>
    %163 = vector.extract_strided_slice %159 {offsets = [0, 32], sizes = [8, 32], strides = [1, 1]} : vector<8x96xf32> to vector<8x32xf32>
    %164 = vector.extract_strided_slice %159 {offsets = [0, 64], sizes = [8, 32], strides = [1, 1]} : vector<8x96xf32> to vector<8x32xf32>
    %165 = arith.mulf %163, %147 : vector<8x32xf32>
    %166 = arith.mulf %162, %161 : vector<8x32xf32>
    %167 = arith.addf %165, %166 : vector<8x32xf32>
    %168 = math.tanh %167 : vector<8x32xf32>
    %169 = arith.mulf %164, %168 : vector<8x32xf32>
    %170 = arith.addf %150, %169 : vector<8x32xf32>
    %c0_27 = arith.constant 0 : index
    %c0_28 = arith.constant 0 : index
    %171 = vector.load %arg5[%c0_27, %c0_28] : memref<32x150xf32, #tpu.memory_space<vmem>>, vector<32x150xf32>
    %cst_29 = arith.constant dense<0.000000e+00> : vector<8x150xf32>
    %172 = tpu.matmul %170, %171, %cst_29 {dimension_numbers = #tpu.dot_dimension_numbers<[1], [0], [0], [1], [0, 0, 1, 1], [], []>} : vector<8x32xf32>, vector<32x150xf32>, vector<8x150xf32> -> vector<8x150xf32>
    %c0_30 = arith.constant 0 : index
    %c0_31 = arith.constant 0 : index
    %173 = vector.load %arg6[%c0_30, %c0_31] : memref<1x150xf32, #tpu.memory_space<vmem>>, vector<1x150xf32>
    %174 = vector.broadcast %173 : vector<1x150xf32> to vector<8x150xf32>
    %175 = arith.addf %172, %174 : vector<8x150xf32>
    %cst_32 = arith.constant 0.000000e+00 : f32
    %176 = vector.broadcast %cst_32 : f32 to vector<8x150xf32>
    %177 = arith.maximumf %175, %176 : vector<8x150xf32>
    %c0_33 = arith.constant 0 : index
    %c0_34 = arith.constant 0 : index
    %178 = vector.load %arg7[%c0_33, %c0_34] : memref<1x150xf32, #tpu.memory_space<vmem>>, vector<1x150xf32>
    %179 = vector.broadcast %178 : vector<1x150xf32> to vector<8x150xf32>
    %180 = arith.mulf %177, %179 : vector<8x150xf32>
    %cst_35 = arith.constant dense<0.000000e+00> : vector<8xf32>
    %181 = vector.multi_reduction <add>, %180, %cst_35 [1] : vector<8x150xf32> to vector<8xf32>
    %182 = vector.shape_cast %181 : vector<8xf32> to vector<8x1xf32>
    %c0_36 = arith.constant 0 : index
    %c0_37 = arith.constant 0 : index
    %183 = vector.load %arg8[%c0_36, %c0_37] : memref<1x1xf32, #tpu.memory_space<vmem>>, vector<1x1xf32>
    %184 = vector.broadcast %183 : vector<1x1xf32> to vector<8x1xf32>
    %185 = arith.addf %182, %184 : vector<8x1xf32>
    %186 = arith.negf %185 : vector<8x1xf32>
    %187 = math.exp %186 : vector<8x1xf32>
    %cst_38 = arith.constant 1.000000e+00 : f32
    %188 = vector.broadcast %cst_38 : f32 to vector<8x1xf32>
    %189 = arith.addf %188, %187 : vector<8x1xf32>
    %190 = arith.divf %188, %189 : vector<8x1xf32>
    %191 = tpu.transpose %190, [1, 0] : vector<8x1xf32> -> vector<1x8xf32>
    %c0_39 = arith.constant 0 : index
    %c0_40 = arith.constant 0 : index
    %192 = vector.load %arg9[%c0_39, %c0_40] : memref<1x8xf32, #tpu.memory_space<vmem>>, vector<1x8xf32>
    tpu.vector_store %arg9[%c0_39, %c0_40], %191 {strides = array<i32>} : memref<1x8xf32, #tpu.memory_space<vmem>>, vector<1x8xf32>,
    return
  }
  func.func @transform_0(%arg0: i32) -> (i32, i32, i32) {
    %c0_i32 = arith.constant 0 : i32
    %c0_i32_0 = arith.constant 0 : i32
    %c0_i32_1 = arith.constant 0 : i32
    return %c0_i32, %arg0, %c0_i32_0 : i32, i32, i32
  }
  func.func @transform_1(%arg0: i32) -> (i32, i32) {
    %c0_i32 = arith.constant 0 : i32
    %c0_i32_0 = arith.constant 0 : i32
    %c0_i32_1 = arith.constant 0 : i32
    return %c0_i32, %c0_i32_0 : i32, i32
  }
  func.func @transform_2(%arg0: i32) -> (i32, i32) {
    %c0_i32 = arith.constant 0 : i32
    %c0_i32_0 = arith.constant 0 : i32
    %c0_i32_1 = arith.constant 0 : i32
    return %c0_i32, %c0_i32_0 : i32, i32
  }
  func.func @transform_3(%arg0: i32) -> (i32, i32) {
    %c0_i32 = arith.constant 0 : i32
    %c0_i32_0 = arith.constant 0 : i32
    %c0_i32_1 = arith.constant 0 : i32
    return %c0_i32, %c0_i32_0 : i32, i32
  }
  func.func @transform_4(%arg0: i32) -> (i32, i32) {
    %c0_i32 = arith.constant 0 : i32
    %c0_i32_0 = arith.constant 0 : i32
    %c0_i32_1 = arith.constant 0 : i32
    return %c0_i32, %c0_i32_0 : i32, i32
  }
  func.func @transform_5(%arg0: i32) -> (i32, i32) {
    %c0_i32 = arith.constant 0 : i32
    %c0_i32_0 = arith.constant 0 : i32
    %c0_i32_1 = arith.constant 0 : i32
    return %c0_i32, %c0_i32_0 : i32, i32
  }
  func.func @transform_6(%arg0: i32) -> (i32, i32) {
    %c0_i32 = arith.constant 0 : i32
    %c0_i32_0 = arith.constant 0 : i32
    %c0_i32_1 = arith.constant 0 : i32
    return %c0_i32, %c0_i32_0 : i32, i32
  }
  func.func @transform_7(%arg0: i32) -> (i32, i32) {
    %c0_i32 = arith.constant 0 : i32
    %c0_i32_0 = arith.constant 0 : i32
    %c0_i32_1 = arith.constant 0 : i32
    return %c0_i32, %c0_i32_0 : i32, i32
  }
  func.func @transform_8(%arg0: i32) -> (i32, i32) {
    %c0_i32 = arith.constant 0 : i32
    %c0_i32_0 = arith.constant 0 : i32
    return %c0_i32, %arg0 : i32, i32
  }
}

</mosaic_0001>

<llo_original>
// kernel: tpu_custom_call.1
$region0: #{tpu_custom_call.1}
  #allocation0 [shape = 'u32[]', space=smem, size = 0x4, offset = 0x4, fixed_abs, tag = 'smem constant byte address 0x4 - core index']
  #allocation1 [shape = 'u32[72,128]{1,0:T(1,128)}', space=vmem, size = 0x9000, scoped, tag = 'internal scratch']
  #allocation2 [shape = 'f32[1,1]{1,0:T(1,128)S(1)}', space=vmem, size = 0x200, scoped, tag = 'scoped memory for tpu_custom_call.1']
  %s0 = inlined_call_operand.hbm [shape: f32[8,8,32], index: 0, kind: input, shape index: {}]
  %s1 = inlined_call_operand.hbm [shape: f32[32,128], index: 1, kind: input, shape index: {}]
  %s2 = inlined_call_operand.hbm [shape: f32[32,128], index: 2, kind: input, shape index: {}]
  %s3 = inlined_call_operand.hbm [shape: f32[1,128], index: 3, kind: input, shape index: {}]
  %s4 = inlined_call_operand.hbm [shape: f32[32,150], index: 4, kind: input, shape index: {}]
  %s5 = inlined_call_operand.vmem [shape: f32[1,150], index: 5, kind: input, shape index: {}]
  %s6 = inlined_call_operand.vmem [shape: f32[1,150], index: 6, kind: input, shape index: {}]
  %s7 = inlined_call_operand.<no memory space> [shape: f32[1,1], index: 7, kind: input, shape index: {}]
  %s8 = inlined_call_operand.hbm [shape: f32[1,8], index: 8, kind: output, shape index: {}]
  %s9 = sld [smem:[#allocation0]]
  $region62: #{tpu_custom_call.1} parent=0
    _
  %s11 = ssub.s32 1, %s9
  %s12 = scalar_select 0, %s11, %s9
  %v13 = vstv %s7
  %14 = vst [vmem:[#allocation2] sm:$0x1] %v13
  $region1: #{tpu_custom_call.1} parent=0
    #allocation3 [shape = 'u8[32768]{0}', space=vmem, size = 0x8000, scoped, tag = 'input window, operand 0, single buffered']
    #allocation4 [shape = 's32[1]{0}', space=sflag, size = 0x4, scoped, tag = 'scoped memory for tpu_custom_call.1']
    #allocation5 [shape = 's32[1]{0}', space=sflag, size = 0x4, scoped, tag = 'scoped memory for tpu_custom_call.1']
    #allocation6 [shape = 'u8[16384]{0}', space=vmem, size = 0x4000, scoped, tag = 'input window, operand 1, single buffered']
    #allocation7 [shape = 's32[1]{0}', space=sflag, size = 0x4, scoped, tag = 'scoped memory for tpu_custom_call.1']
    #allocation8 [shape = 'u8[16384]{0}', space=vmem, size = 0x4000, scoped, tag = 'input window, operand 2, single buffered']
    #allocation9 [shape = 'u8[512]{0}', space=vmem, size = 0x400, scoped, tag = 'input window, operand 3, single buffered']
    #allocation10 [shape = 's32[1]{0}', space=sflag, size = 0x4, scoped, tag = 'scoped memory for tpu_custom_call.1']
    #allocation11 [shape = 'u8[32768]{0}', space=vmem, size = 0x8000, scoped, tag = 'input window, operand 4, single buffered']
    #allocation12 [shape = 'u8[512]{0}', space=vmem, size = 0x400, scoped, tag = 'output window, operand 0, single buffered']
    %15 = vsyncpa [#allocation4], 0
    %16 = vsyncpa [#allocation7], 0
    %17 = vsyncpa [#allocation10], 0
    %18 = vsyncpa [#allocation5], 0
    // Predicated region
    $region2: #{tpu_custom_call.1} parent=1 // pred_check
      _
    $region3: #{tpu_custom_call.1} parent=1 // pred_check_branch
      %20 = sbr.rel (0) target = $region5
    $region4: #{tpu_custom_call.1} parent=1 // pred_region
      %22 = vsyncadd [#allocation4], 0
      %s23 = sshll.u32 %s0, 4
      %s24 = int_to_ptr.hbm [resolvable:$true] %s23
      %s25 = sshll.u32 [#allocation3], 4
      %s26 = int_to_ptr.vmem [resolvable:$true] %s25
      %31 = dma.hbm_to_vmem [thread:$0]  %s24, 1024, %s26, [#allocation4], 128, 128, 8
    $region5: #{tpu_custom_call.1} parent=1 // pred_fallthru
      _
    // Predicated region
    $region6: #{tpu_custom_call.1} parent=1 // pred_check
      _
    $region7: #{tpu_custom_call.1} parent=1 // pred_check_branch
      %33 = sbr.rel (0) target = $region9
    $region8: #{tpu_custom_call.1} parent=1 // pred_region
      %35 = vsyncadd [#allocation7], 0
      %s36 = sshll.u32 %s1, 4
      %s37 = int_to_ptr.hbm [resolvable:$true] %s36
      %s38 = sshll.u32 [#allocation6], 4
      %s39 = int_to_ptr.vmem [resolvable:$true] %s38
      %44 = dma.hbm_to_vmem [thread:$0]  %s37, 512, %s39, [#allocation7], 128, 128, 8
    $region9: #{tpu_custom_call.1} parent=1 // pred_fallthru
      _
    // Predicated region
    $region10: #{tpu_custom_call.1} parent=1 // pred_check
      _
    $region11: #{tpu_custom_call.1} parent=1 // pred_check_branch
      %46 = sbr.rel (0) target = $region13
    $region12: #{tpu_custom_call.1} parent=1 // pred_region
      %48 = vsyncadd [#allocation7], 0
      %s49 = sshll.u32 %s2, 4
      %s50 = int_to_ptr.hbm [resolvable:$true] %s49
      %s51 = sshll.u32 [#allocation8], 4
      %s52 = int_to_ptr.vmem [resolvable:$true] %s51
      %57 = dma.hbm_to_vmem [thread:$0]  %s50, 512, %s52, [#allocation7], 128, 128, 8
    $region13: #{tpu_custom_call.1} parent=1 // pred_fallthru
      _
    // Predicated region
    $region14: #{tpu_custom_call.1} parent=1 // pred_check
      _
    $region15: #{tpu_custom_call.1} parent=1 // pred_check_branch
      %59 = sbr.rel (0) target = $region17
    $region16: #{tpu_custom_call.1} parent=1 // pred_region
      %61 = vsyncadd [#allocation10], 0
      %s63 = sshll.u32 %s3, 4
      %s64 = int_to_ptr.hbm [resolvable:$true] %s63
      %s65 = sshll.u32 [#allocation9], 4
      %s66 = int_to_ptr.vmem [resolvable:$true] %s65
      %68 = dma.hbm_to_vmem [thread:$0]  %s64, 16, %s66, [#allocation10]
    $region17: #{tpu_custom_call.1} parent=1 // pred_fallthru
      _
    // Predicated region
    $region18: #{tpu_custom_call.1} parent=1 // pred_check
      _
    $region19: #{tpu_custom_call.1} parent=1 // pred_check_branch
      %70 = sbr.rel (0) target = $region21
    $region20: #{tpu_custom_call.1} parent=1 // pred_region
      %72 = vsyncadd [#allocation10], 0
      %s73 = sshll.u32 %s4, 4
      %s74 = int_to_ptr.hbm [resolvable:$true] %s73
      %s75 = sshll.u32 [#allocation11], 4
      %s76 = int_to_ptr.vmem [resolvable:$true] %s75
      %81 = dma.hbm_to_vmem [thread:$0]  %s74, 1024, %s76, [#allocation10], 256, 256, 16
    $region21: #{tpu_custom_call.1} parent=1 // pred_fallthru
      _
    // Predicated region
    $region22: #{tpu_custom_call.1} parent=1 // pred_check
      _
    $region23: #{tpu_custom_call.1} parent=1 // pred_check_branch
      %83 = sbr.rel (0) target = $region25
    $region24: #{tpu_custom_call.1} parent=1 // pred_region
      _
    $region25: #{tpu_custom_call.1} parent=1 // pred_fallthru
      _
    // Predicated region
    $region26: #{tpu_custom_call.1} parent=1 // pred_check
      _
    $region27: #{tpu_custom_call.1} parent=1 // pred_check_branch
      %85 = sbr.rel (0) target = $region29
    $region28: #{tpu_custom_call.1} parent=1 // pred_region
      _
    $region29: #{tpu_custom_call.1} parent=1 // pred_fallthru
      _
    // Predicated region
    $region30: #{tpu_custom_call.1} parent=1 // pred_check
      _
    $region31: #{tpu_custom_call.1} parent=1 // pred_check_branch
      %87 = sbr.rel (0) target = $region33
    $region32: #{tpu_custom_call.1} parent=1 // pred_region
      _
    $region33: #{tpu_custom_call.1} parent=1 // pred_fallthru
      _
    // Predicated region
    $region34: #{tpu_custom_call.1} parent=1 // pred_check
      _
    $region35: #{tpu_custom_call.1} parent=1 // pred_check_branch
      %89 = sbr.rel (0) target = $region37
    $region36: #{tpu_custom_call.1} parent=1 // pred_region
      %91 = dma.done [#allocation4], 1024
    $region37: #{tpu_custom_call.1} parent=1 // pred_fallthru
      _
    // Predicated region
    $region38: #{tpu_custom_call.1} parent=1 // pred_check
      _
    $region39: #{tpu_custom_call.1} parent=1 // pred_check_branch
      %93 = sbr.rel (0) target = $region41
    $region40: #{tpu_custom_call.1} parent=1 // pred_region
      %95 = dma.done [#allocation7], 512
    $region41: #{tpu_custom_call.1} parent=1 // pred_fallthru
      _
    // Predicated region
    $region42: #{tpu_custom_call.1} parent=1 // pred_check
      _
    $region43: #{tpu_custom_call.1} parent=1 // pred_check_branch
      %97 = sbr.rel (0) target = $region45
    $region44: #{tpu_custom_call.1} parent=1 // pred_region
      %99 = dma.done [#allocation7], 512
    $region45: #{tpu_custom_call.1} parent=1 // pred_fallthru
      _
    // Predicated region
    $region46: #{tpu_custom_call.1} parent=1 // pred_check
      _
    $region47: #{tpu_custom_call.1} parent=1 // pred_check_branch
      %101 = sbr.rel (0) target = $region49
    $region48: #{tpu_custom_call.1} parent=1 // pred_region
      %103 = dma.done [#allocation10], 16
    $region49: #{tpu_custom_call.1} parent=1 // pred_fallthru
      _
    // Predicated region
    $region50: #{tpu_custom_call.1} parent=1 // pred_check
      _
    $region51: #{tpu_custom_call.1} parent=1 // pred_check_branch
      %105 = sbr.rel (0) target = $region53
    $region52: #{tpu_custom_call.1} parent=1 // pred_region
      %107 = dma.done [#allocation10], 1024
    $region53: #{tpu_custom_call.1} parent=1 // pred_fallthru
      _
    %v108 = vld [vmem:[#allocation6] sm:$0xff]
    %v109 = vld [vmem:[#allocation6 + $0x8] sm:$0xff]
    %v110 = vld [vmem:[#allocation6 + $0x10] sm:$0xff]
    %v111 = vld [vmem:[#allocation6 + $0x18] sm:$0xff]
    %v112 = vld [vmem:[#allocation8] sm:$0xff]
    %v113 = vld [vmem:[#allocation8 + $0x8] sm:$0xff]
    %v114 = vld [vmem:[#allocation8 + $0x10] sm:$0xff]
    %v115 = vld [vmem:[#allocation8 + $0x18] sm:$0xff]
    %v116 = vld [vmem:[#allocation9] sm:$0x1]
    %v117 = vld [vmem:[#allocation3] sm:$0xff]
    %v118 = vld [vmem:[#allocation3 + $0x8] sm:$0xff]
    %v119 = vld [vmem:[#allocation3 + $0x10] sm:$0xff]
    %v120 = vld [vmem:[#allocation3 + $0x18] sm:$0xff]
    %v121 = vld [vmem:[#allocation3 + $0x20] sm:$0xff]
    %v122 = vld [vmem:[#allocation3 + $0x28] sm:$0xff]
    %v123 = vld [vmem:[#allocation3 + $0x30] sm:$0xff]
    %v124 = vld [vmem:[#allocation3 + $0x38] sm:$0xff]
    %v126 = vperm.slane %v116, 0
    %vm128 = vcmask 261120
    %v130 = vsel %vm128, %v117, 0
    %v133 = vsel %vm128, %v118, 0
    %v136 = vsel %vm128, %v119, 0
    %v139 = vsel %vm128, %v120, 0
    %v142 = vsel %vm128, %v121, 0
    %v145 = vsel %vm128, %v122, 0
    %v148 = vsel %vm128, %v123, 0
    %v151 = vsel %vm128, %v124, 0
    %153 = vmatpush.msra.mxu0 0.0
    %154 = vmatpush.msra.mxu0 0.0
    %155 = vmatpush.msra.mxu0 0.0
    %156 = vmatpush.msra.mxu0 0.0
    %157 = vmatpush.msra.mxu0 0.0
    %158 = vmatpush.msra.mxu0 0.0
    %159 = vmatpush.msra.mxu0 0.0
    %160 = vmatpush.msra.mxu0 0.0
    %161 = vmatpush.msra.mxu0 0.0
    %162 = vmatpush.msra.mxu0 0.0
    %163 = vmatpush.msra.mxu0 0.0
    %164 = vmatpush.msra.mxu0 0.0
    %165 = vmatpush.msra.mxu0 %v111
    %166 = vmatpush.msra.mxu0 %v110
    %167 = vmatpush.msra.mxu0 %v109
    %168 = vmatpush.msra.mxu0 %v108
    %169 = vmatmul.f32.gmra.mxu0 %v130
    %v170 = vpop.f32.mrf.mxu0
    %v171 = vadd.f32 %v126, %v170
    %172 = vmatmul.f32.gmra.mxu0 %v133
    %v173 = vpop.f32.mrf.mxu0
    %v174 = vadd.f32 %v126, %v173
    %175 = vmatmul.f32.gmra.mxu0 %v136
    %v176 = vpop.f32.mrf.mxu0
    %v177 = vadd.f32 %v126, %v176
    %178 = vmatmul.f32.gmra.mxu0 %v139
    %v179 = vpop.f32.mrf.mxu0
    %v180 = vadd.f32 %v126, %v179
    %181 = vmatmul.f32.gmra.mxu0 %v142
    %v182 = vpop.f32.mrf.mxu0
    %v183 = vadd.f32 %v126, %v182
    %184 = vmatmul.f32.gmra.mxu0 %v145
    %v185 = vpop.f32.mrf.mxu0
    %v186 = vadd.f32 %v126, %v185
    %187 = vmatmul.f32.gmra.mxu0 %v148
    %v188 = vpop.f32.mrf.mxu0
    %v189 = vadd.f32 %v126, %v188
    %190 = vmatmul.f32.gmra.mxu0 %v151
    %v191 = vpop.f32.mrf.mxu0
    %v192 = vadd.f32 %v126, %v191
    %193 = vdwg.mxu0
    %v195 = vsel %vm128, 0.0, 0
    %197 = vmatpush.msra.mxu0 0.0
    %198 = vmatpush.msra.mxu0 0.0
    %199 = vmatpush.msra.mxu0 0.0
    %200 = vmatpush.msra.mxu0 0.0
    %201 = vmatpush.msra.mxu0 0.0
    %202 = vmatpush.msra.mxu0 0.0
    %203 = vmatpush.msra.mxu0 0.0
    %204 = vmatpush.msra.mxu0 0.0
    %205 = vmatpush.msra.mxu0 0.0
    %206 = vmatpush.msra.mxu0 0.0
    %207 = vmatpush.msra.mxu0 0.0
    %208 = vmatpush.msra.mxu0 0.0
    %209 = vmatpush.msra.mxu0 %v115
    %210 = vmatpush.msra.mxu0 %v114
    %211 = vmatpush.msra.mxu0 %v113
    %212 = vmatpush.msra.mxu0 %v112
    %213 = vmatmul.f32.gmra.mxu0 %v195
    %v214 = vpop.f32.mrf.mxu0
    %v215 = vadd.f32 0.0, %v214
    %216 = vdwg.mxu0
    %v217 = vadd.f32 %v171, %v215
    %v218 = vxor.u32 %v217, 2147483648
    %v219 = vmul.f32 %v218, 1.442695
    %v220 = vpow.pop %v219
    %v221 = vadd.f32 %v220, 1.0
    %v222 = vrcp.pop %v221
    %v223 = vmul.f32 %v221, %v222
    %v224 = vsub.f32 1.0, %v223
    %v225 = vmul.f32 %v222, %v224
    %v226 = vadd.f32 %v222, %v225
    %vm227 = vweird.f32 %v221
    %vm228 = vweird.f32 %v222
    %vm229 = vmor %vm227, %vm228
    %v230 = vsel %vm229, %v222, %v226
    %v231 = vand.u32 2147483647, %v221
    %vm232 = vcmp.eq.f32.partialorder %v231, 8.507059e+37
    %v233 = vand.u32 %v221, 2147483648
    %v234 = vor.u32 1.1754944e-38, %v233
    %v235 = vsel %vm232, %v234, %v230
    %v236 = vmul.f32 1.0, %v235
    %v237 = vtanh.pop %v217
    %v238 = vmul.f32 %v236, 0.0
    %240 = vrot.lane.b32.xlu0 %v237, 32
    %v241 = vpop.permute.xlu0 %240
    %v243 = vmul.f32 %v236, %v241
    %245 = vrot.lane.b32.xlu0 %v243, 32
    %v246 = vpop.permute.xlu0 %245
    %v248 = vadd.f32 %v238, %v246
    %v249 = vtanh.pop %v248
    %251 = vrot.lane.b32.xlu0 %v249, 32
    %v252 = vpop.permute.xlu0 %251
    %v254 = vmul.f32 %v236, %v252
    %v255 = vadd.f32 %v254, 0.0
    %257 = vrot.lane.b32.xlu0 %v254, 64
    %v258 = vpop.permute.xlu0 %257
    %v259 = vsel %vm128, %v258, 0
    %261 = vmatpush.msra.mxu0 0.0
    %262 = vmatpush.msra.mxu0 0.0
    %263 = vmatpush.msra.mxu0 0.0
    %264 = vmatpush.msra.mxu0 0.0
    %265 = vmatpush.msra.mxu0 0.0
    %266 = vmatpush.msra.mxu0 0.0
    %267 = vmatpush.msra.mxu0 0.0
    %268 = vmatpush.msra.mxu0 0.0
    %269 = vmatpush.msra.mxu0 0.0
    %270 = vmatpush.msra.mxu0 0.0
    %271 = vmatpush.msra.mxu0 0.0
    %272 = vmatpush.msra.mxu0 0.0
    %273 = vmatpush.msra.mxu0 %v115
    %274 = vmatpush.msra.mxu0 %v114
    %275 = vmatpush.msra.mxu0 %v113
    %276 = vmatpush.msra.mxu0 %v112
    %277 = vmatmul.f32.gmra.mxu0 %v259
    %v278 = vpop.f32.mrf.mxu0
    %v279 = vadd.f32 0.0, %v278
    %280 = vdwg.mxu0
    %v281 = vadd.f32 %v174, %v279
    %v282 = vxor.u32 %v281, 2147483648
    %v283 = vmul.f32 %v282, 1.442695
    %v284 = vpow.pop %v283
    %v285 = vadd.f32 %v284, 1.0
    %v286 = vrcp.pop %v285
    %v287 = vmul.f32 %v285, %v286
    %v288 = vsub.f32 1.0, %v287
    %v289 = vmul.f32 %v286, %v288
    %v290 = vadd.f32 %v286, %v289
    %vm291 = vweird.f32 %v285
    %vm292 = vweird.f32 %v286
    %vm293 = vmor %vm291, %vm292
    %v294 = vsel %vm293, %v286, %v290
    %v295 = vand.u32 2147483647, %v285
    %vm296 = vcmp.eq.f32.partialorder %v295, 8.507059e+37
    %v297 = vand.u32 %v285, 2147483648
    %v298 = vor.u32 1.1754944e-38, %v297
    %v299 = vsel %vm296, %v298, %v294
    %v300 = vmul.f32 1.0, %v299
    %v301 = vtanh.pop %v281
    %v302 = vmul.f32 %v300, %v248
    %304 = vrot.lane.b32.xlu0 %v301, 32
    %v305 = vpop.permute.xlu0 %304
    %v307 = vmul.f32 %v300, %v305
    %309 = vrot.lane.b32.xlu0 %v307, 32
    %v310 = vpop.permute.xlu0 %309
    %v312 = vadd.f32 %v302, %v310
    %v313 = vtanh.pop %v312
    %315 = vrot.lane.b32.xlu0 %v313, 32
    %v316 = vpop.permute.xlu0 %315
    %v318 = vmul.f32 %v300, %v316
    %v319 = vadd.f32 %v255, %v318
    %321 = vrot.lane.b32.xlu0 %v318, 64
    %v322 = vpop.permute.xlu0 %321
    %v323 = vsel %vm128, %v322, 0
    %325 = vmatpush.msra.mxu0 0.0
    %326 = vmatpush.msra.mxu0 0.0
    %327 = vmatpush.msra.mxu0 0.0
    %328 = vmatpush.msra.mxu0 0.0
    %329 = vmatpush.msra.mxu0 0.0
    %330 = vmatpush.msra.mxu0 0.0
    %331 = vmatpush.msra.mxu0 0.0
    %332 = vmatpush.msra.mxu0 0.0
    %333 = vmatpush.msra.mxu0 0.0
    %334 = vmatpush.msra.mxu0 0.0
    %335 = vmatpush.msra.mxu0 0.0
    %336 = vmatpush.msra.mxu0 0.0
    %337 = vmatpush.msra.mxu0 %v115
    %338 = vmatpush.msra.mxu0 %v114
    %339 = vmatpush.msra.mxu0 %v113
    %340 = vmatpush.msra.mxu0 %v112
    %341 = vmatmul.f32.gmra.mxu0 %v323
    %v342 = vpop.f32.mrf.mxu0
    %v343 = vadd.f32 0.0, %v342
    %344 = vdwg.mxu0
    %v345 = vadd.f32 %v177, %v343
    %v346 = vxor.u32 %v345, 2147483648
    %v347 = vmul.f32 %v346, 1.442695
    %v348 = vpow.pop %v347
    %v349 = vadd.f32 %v348, 1.0
    %v350 = vrcp.pop %v349
    %v351 = vmul.f32 %v349, %v350
    %v352 = vsub.f32 1.0, %v351
    %v353 = vmul.f32 %v350, %v352
    %v354 = vadd.f32 %v350, %v353
    %vm355 = vweird.f32 %v349
    %vm356 = vweird.f32 %v350
    %vm357 = vmor %vm355, %vm356
    %v358 = vsel %vm357, %v350, %v354
    %v359 = vand.u32 2147483647, %v349
    %vm360 = vcmp.eq.f32.partialorder %v359, 8.507059e+37
    %v361 = vand.u32 %v349, 2147483648
    %v362 = vor.u32 1.1754944e-38, %v361
    %v363 = vsel %vm360, %v362, %v358
    %v364 = vmul.f32 1.0, %v363
    %v365 = vtanh.pop %v345
    %v366 = vmul.f32 %v364, %v312
    %368 = vrot.lane.b32.xlu0 %v365, 32
    %v369 = vpop.permute.xlu0 %368
    %v371 = vmul.f32 %v364, %v369
    %373 = vrot.lane.b32.xlu0 %v371, 32
    %v374 = vpop.permute.xlu0 %373
    %v376 = vadd.f32 %v366, %v374
    %v377 = vtanh.pop %v376
    %379 = vrot.lane.b32.xlu0 %v377, 32
    %v380 = vpop.permute.xlu0 %379
    %v382 = vmul.f32 %v364, %v380
    %v383 = vadd.f32 %v319, %v382
    %385 = vrot.lane.b32.xlu0 %v382, 64
    %v386 = vpop.permute.xlu0 %385
    %v387 = vsel %vm128, %v386, 0
    %389 = vmatpush.msra.mxu0 0.0
    %390 = vmatpush.msra.mxu0 0.0
    %391 = vmatpush.msra.mxu0 0.0
    %392 = vmatpush.msra.mxu0 0.0
    %393 = vmatpush.msra.mxu0 0.0
    %394 = vmatpush.msra.mxu0 0.0
    %395 = vmatpush.msra.mxu0 0.0
    %396 = vmatpush.msra.mxu0 0.0
    %397 = vmatpush.msra.mxu0 0.0
    %398 = vmatpush.msra.mxu0 0.0
    %399 = vmatpush.msra.mxu0 0.0
    %400 = vmatpush.msra.mxu0 0.0
    %401 = vmatpush.msra.mxu0 %v115
    %402 = vmatpush.msra.mxu0 %v114
    %403 = vmatpush.msra.mxu0 %v113
    %404 = vmatpush.msra.mxu0 %v112
    %405 = vmatmul.f32.gmra.mxu0 %v387
    %v406 = vpop.f32.mrf.mxu0
    %v407 = vadd.f32 0.0, %v406
    %408 = vdwg.mxu0
    %v409 = vadd.f32 %v180, %v407
    %v410 = vxor.u32 %v409, 2147483648
    %v411 = vmul.f32 %v410, 1.442695
    %v412 = vpow.pop %v411
    %v413 = vadd.f32 %v412, 1.0
    %v414 = vrcp.pop %v413
    %v415 = vmul.f32 %v413, %v414
    %v416 = vsub.f32 1.0, %v415
    %v417 = vmul.f32 %v414, %v416
    %v418 = vadd.f32 %v414, %v417
    %vm419 = vweird.f32 %v413
    %vm420 = vweird.f32 %v414
    %vm421 = vmor %vm419, %vm420
    %v422 = vsel %vm421, %v414, %v418
    %v423 = vand.u32 2147483647, %v413
    %vm424 = vcmp.eq.f32.partialorder %v423, 8.507059e+37
    %v425 = vand.u32 %v413, 2147483648
    %v426 = vor.u32 1.1754944e-38, %v425
    %v427 = vsel %vm424, %v426, %v422
    %v428 = vmul.f32 1.0, %v427
    %v429 = vtanh.pop %v409
    %v430 = vmul.f32 %v428, %v376
    %432 = vrot.lane.b32.xlu0 %v429, 32
    %v433 = vpop.permute.xlu0 %432
    %v435 = vmul.f32 %v428, %v433
    %437 = vrot.lane.b32.xlu0 %v435, 32
    %v438 = vpop.permute.xlu0 %437
    %v440 = vadd.f32 %v430, %v438
    %v441 = vtanh.pop %v440
    %443 = vrot.lane.b32.xlu0 %v441, 32
    %v444 = vpop.permute.xlu0 %443
    %v446 = vmul.f32 %v428, %v444
    %v447 = vadd.f32 %v383, %v446
    %449 = vrot.lane.b32.xlu0 %v446, 64
    %v450 = vpop.permute.xlu0 %449
    %v451 = vsel %vm128, %v450, 0
    %453 = vmatpush.msra.mxu0 0.0
    %454 = vmatpush.msra.mxu0 0.0
    %455 = vmatpush.msra.mxu0 0.0
    %456 = vmatpush.msra.mxu0 0.0
    %457 = vmatpush.msra.mxu0 0.0
    %458 = vmatpush.msra.mxu0 0.0
    %459 = vmatpush.msra.mxu0 0.0
    %460 = vmatpush.msra.mxu0 0.0
    %461 = vmatpush.msra.mxu0 0.0
    %462 = vmatpush.msra.mxu0 0.0
    %463 = vmatpush.msra.mxu0 0.0
    %464 = vmatpush.msra.mxu0 0.0
    %465 = vmatpush.msra.mxu0 %v115
    %466 = vmatpush.msra.mxu0 %v114
    %467 = vmatpush.msra.mxu0 %v113
    %468 = vmatpush.msra.mxu0 %v112
    %469 = vmatmul.f32.gmra.mxu0 %v451
    %v470 = vpop.f32.mrf.mxu0
    %v471 = vadd.f32 0.0, %v470
    %472 = vdwg.mxu0
    %v473 = vadd.f32 %v183, %v471
    %v474 = vxor.u32 %v473, 2147483648
    %v475 = vmul.f32 %v474, 1.442695
    %v476 = vpow.pop %v475
    %v477 = vadd.f32 %v476, 1.0
    %v478 = vrcp.pop %v477
    %v479 = vmul.f32 %v477, %v478
    %v480 = vsub.f32 1.0, %v479
    %v481 = vmul.f32 %v478, %v480
    %v482 = vadd.f32 %v478, %v481
    %vm483 = vweird.f32 %v477
    %vm484 = vweird.f32 %v478
    %vm485 = vmor %vm483, %vm484
    %v486 = vsel %vm485, %v478, %v482
    %v487 = vand.u32 2147483647, %v477
    %vm488 = vcmp.eq.f32.partialorder %v487, 8.507059e+37
    %v489 = vand.u32 %v477, 2147483648
    %v490 = vor.u32 1.1754944e-38, %v489
    %v491 = vsel %vm488, %v490, %v486
    %v492 = vmul.f32 1.0, %v491
    %v493 = vtanh.pop %v473
    %v494 = vmul.f32 %v492, %v440
    %496 = vrot.lane.b32.xlu0 %v493, 32
    %v497 = vpop.permute.xlu0 %496
    %v499 = vmul.f32 %v492, %v497
    %501 = vrot.lane.b32.xlu0 %v499, 32
    %v502 = vpop.permute.xlu0 %501
    %v504 = vadd.f32 %v494, %v502
    %v505 = vtanh.pop %v504
    %507 = vrot.lane.b32.xlu0 %v505, 32
    %v508 = vpop.permute.xlu0 %507
    %v510 = vmul.f32 %v492, %v508
    %v511 = vadd.f32 %v447, %v510
    %513 = vrot.lane.b32.xlu0 %v510, 64
    %v514 = vpop.permute.xlu0 %513
    %v515 = vsel %vm128, %v514, 0
    %517 = vmatpush.msra.mxu0 0.0
    %518 = vmatpush.msra.mxu0 0.0
    %519 = vmatpush.msra.mxu0 0.0
    %520 = vmatpush.msra.mxu0 0.0
    %521 = vmatpush.msra.mxu0 0.0
    %522 = vmatpush.msra.mxu0 0.0
    %523 = vmatpush.msra.mxu0 0.0
    %524 = vmatpush.msra.mxu0 0.0
    %525 = vmatpush.msra.mxu0 0.0
    %526 = vmatpush.msra.mxu0 0.0
    %527 = vmatpush.msra.mxu0 0.0
    %528 = vmatpush.msra.mxu0 0.0
    %529 = vmatpush.msra.mxu0 %v115
    %530 = vmatpush.msra.mxu0 %v114
    %531 = vmatpush.msra.mxu0 %v113
    %532 = vmatpush.msra.mxu0 %v112
    %533 = vmatmul.f32.gmra.mxu0 %v515
    %v534 = vpop.f32.mrf.mxu0
    %v535 = vadd.f32 0.0, %v534
    %536 = vdwg.mxu0
    %v537 = vadd.f32 %v186, %v535
    %v538 = vxor.u32 %v537, 2147483648
    %v539 = vmul.f32 %v538, 1.442695
    %v540 = vpow.pop %v539
    %v541 = vadd.f32 %v540, 1.0
    %v542 = vrcp.pop %v541
    %v543 = vmul.f32 %v541, %v542
    %v544 = vsub.f32 1.0, %v543
    %v545 = vmul.f32 %v542, %v544
    %v546 = vadd.f32 %v542, %v545
    %vm547 = vweird.f32 %v541
    %vm548 = vweird.f32 %v542
    %vm549 = vmor %vm547, %vm548
    %v550 = vsel %vm549, %v542, %v546
    %v551 = vand.u32 2147483647, %v541
    %vm552 = vcmp.eq.f32.partialorder %v551, 8.507059e+37
    %v553 = vand.u32 %v541, 2147483648
    %v554 = vor.u32 1.1754944e-38, %v553
    %v555 = vsel %vm552, %v554, %v550
    %v556 = vmul.f32 1.0, %v555
    %v557 = vtanh.pop %v537
    %v558 = vmul.f32 %v556, %v504
    %560 = vrot.lane.b32.xlu0 %v557, 32
    %v561 = vpop.permute.xlu0 %560
    %v563 = vmul.f32 %v556, %v561
    %565 = vrot.lane.b32.xlu0 %v563, 32
    %v566 = vpop.permute.xlu0 %565
    %v568 = vadd.f32 %v558, %v566
    %v569 = vtanh.pop %v568
    %571 = vrot.lane.b32.xlu0 %v569, 32
    %v572 = vpop.permute.xlu0 %571
    %v574 = vmul.f32 %v556, %v572
    %v575 = vadd.f32 %v511, %v574
    %577 = vrot.lane.b32.xlu0 %v574, 64
    %v578 = vpop.permute.xlu0 %577
    %v579 = vsel %vm128, %v578, 0
    %581 = vmatpush.msra.mxu0 0.0
    %582 = vmatpush.msra.mxu0 0.0
    %583 = vmatpush.msra.mxu0 0.0
    %584 = vmatpush.msra.mxu0 0.0
    %585 = vmatpush.msra.mxu0 0.0
    %586 = vmatpush.msra.mxu0 0.0
    %587 = vmatpush.msra.mxu0 0.0
    %588 = vmatpush.msra.mxu0 0.0
    %589 = vmatpush.msra.mxu0 0.0
    %590 = vmatpush.msra.mxu0 0.0
    %591 = vmatpush.msra.mxu0 0.0
    %592 = vmatpush.msra.mxu0 0.0
    %593 = vmatpush.msra.mxu0 %v115
    %594 = vmatpush.msra.mxu0 %v114
    %595 = vmatpush.msra.mxu0 %v113
    %596 = vmatpush.msra.mxu0 %v112
    %597 = vmatmul.f32.gmra.mxu0 %v579
    %v598 = vpop.f32.mrf.mxu0
    %v599 = vadd.f32 0.0, %v598
    %600 = vdwg.mxu0
    %v601 = vadd.f32 %v189, %v599
    %v602 = vxor.u32 %v601, 2147483648
    %v603 = vmul.f32 %v602, 1.442695
    %v604 = vpow.pop %v603
    %v605 = vadd.f32 %v604, 1.0
    %v606 = vrcp.pop %v605
    %v607 = vmul.f32 %v605, %v606
    %v608 = vsub.f32 1.0, %v607
    %v609 = vmul.f32 %v606, %v608
    %v610 = vadd.f32 %v606, %v609
    %vm611 = vweird.f32 %v605
    %vm612 = vweird.f32 %v606
    %vm613 = vmor %vm611, %vm612
    %v614 = vsel %vm613, %v606, %v610
    %v615 = vand.u32 2147483647, %v605
    %vm616 = vcmp.eq.f32.partialorder %v615, 8.507059e+37
    %v617 = vand.u32 %v605, 2147483648
    %v618 = vor.u32 1.1754944e-38, %v617
    %v619 = vsel %vm616, %v618, %v614
    %v620 = vmul.f32 1.0, %v619
    %v621 = vtanh.pop %v601
    %v622 = vmul.f32 %v620, %v568
    %624 = vrot.lane.b32.xlu0 %v621, 32
    %v625 = vpop.permute.xlu0 %624
    %v627 = vmul.f32 %v620, %v625
    %629 = vrot.lane.b32.xlu0 %v627, 32
    %v630 = vpop.permute.xlu0 %629
    %v632 = vadd.f32 %v622, %v630
    %v633 = vtanh.pop %v632
    %635 = vrot.lane.b32.xlu0 %v633, 32
    %v636 = vpop.permute.xlu0 %635
    %v638 = vmul.f32 %v620, %v636
    %v639 = vadd.f32 %v575, %v638
    %641 = vrot.lane.b32.xlu0 %v638, 64
    %v642 = vpop.permute.xlu0 %641
    %v643 = vsel %vm128, %v642, 0
    %645 = vmatpush.msra.mxu0 0.0
    %646 = vmatpush.msra.mxu0 0.0
    %647 = vmatpush.msra.mxu0 0.0
    %648 = vmatpush.msra.mxu0 0.0
    %649 = vmatpush.msra.mxu0 0.0
    %650 = vmatpush.msra.mxu0 0.0
    %651 = vmatpush.msra.mxu0 0.0
    %652 = vmatpush.msra.mxu0 0.0
    %653 = vmatpush.msra.mxu0 0.0
    %654 = vmatpush.msra.mxu0 0.0
    %655 = vmatpush.msra.mxu0 0.0
    %656 = vmatpush.msra.mxu0 0.0
    %657 = vmatpush.msra.mxu0 %v115
    %658 = vmatpush.msra.mxu0 %v114
    %659 = vmatpush.msra.mxu0 %v113
    %660 = vmatpush.msra.mxu0 %v112
    %661 = vmatmul.f32.gmra.mxu0 %v643
    %v662 = vpop.f32.mrf.mxu0
    %v663 = vadd.f32 0.0, %v662
    %664 = vdwg.mxu0
    %v665 = vadd.f32 %v192, %v663
    %v666 = vxor.u32 %v665, 2147483648
    %v667 = vmul.f32 %v666, 1.442695
    %v668 = vpow.pop %v667
    %v669 = vadd.f32 %v668, 1.0
    %v670 = vrcp.pop %v669
    %v671 = vmul.f32 %v669, %v670
    %v672 = vsub.f32 1.0, %v671
    %v673 = vmul.f32 %v670, %v672
    %v674 = vadd.f32 %v670, %v673
    %vm675 = vweird.f32 %v669
    %vm676 = vweird.f32 %v670
    %vm677 = vmor %vm675, %vm676
    %v678 = vsel %vm677, %v670, %v674
    %v679 = vand.u32 2147483647, %v669
    %vm680 = vcmp.eq.f32.partialorder %v679, 8.507059e+37
    %v681 = vand.u32 %v669, 2147483648
    %v682 = vor.u32 1.1754944e-38, %v681
    %v683 = vsel %vm680, %v682, %v678
    %v684 = vmul.f32 1.0, %v683
    %v685 = vtanh.pop %v665
    %v686 = vmul.f32 %v684, %v632
    %688 = vrot.lane.b32.xlu0 %v685, 32
    %v689 = vpop.permute.xlu0 %688
    %v691 = vmul.f32 %v684, %v689
    %693 = vrot.lane.b32.xlu0 %v691, 32
    %v694 = vpop.permute.xlu0 %693
    %v696 = vadd.f32 %v686, %v694
    %v697 = vtanh.pop %v696
    %699 = vrot.lane.b32.xlu0 %v697, 32
    %v700 = vpop.permute.xlu0 %699
    %v702 = vmul.f32 %v684, %v700
    %v703 = vadd.f32 %v639, %v702
    %v704 = vld [vmem:[#allocation11] sm:$0xff]
    %v705 = vld [vmem:[#allocation11 + $0x8] sm:$0xff]
    %v706 = vld [vmem:[#allocation11 + $0x10] sm:$0xff]
    %v707 = vld [vmem:[#allocation11 + $0x18] sm:$0xff]
    %v708 = vld [vmem:[#allocation11 + $0x20] sm:$0xff]
    %v709 = vld [vmem:[#allocation11 + $0x28] sm:$0xff]
    %v710 = vld [vmem:[#allocation11 + $0x30] sm:$0xff]
    %v711 = vld [vmem:[#allocation11 + $0x38] sm:$0xff]
    %v712 = vld [vmem:[%s5] sm:$0x3]
    %v714 = vperm.slane %v712, 0
    %v715 = vperm.slane %v712, 1
    %719 = vrot.lane.b32.xlu0 %v703, 64
    %v720 = vpop.permute.xlu0 %719
    %v721 = vsel %vm128, %v720, 0
    %723 = vmatpush.msra.mxu0 0.0
    %724 = vmatpush.msra.mxu0 0.0
    %725 = vmatpush.msra.mxu0 0.0
    %726 = vmatpush.msra.mxu0 0.0
    %727 = vmatpush.msra.mxu0 0.0
    %728 = vmatpush.msra.mxu0 0.0
    %729 = vmatpush.msra.mxu0 0.0
    %730 = vmatpush.msra.mxu0 0.0
    %731 = vmatpush.msra.mxu0 0.0
    %732 = vmatpush.msra.mxu0 0.0
    %733 = vmatpush.msra.mxu0 0.0
    %734 = vmatpush.msra.mxu0 0.0
    %735 = vmatpush.msra.mxu0 %v710
    %736 = vmatpush.msra.mxu0 %v708
    %737 = vmatpush.msra.mxu0 %v706
    %738 = vmatpush.msra.mxu0 %v704
    %739 = vmatmul.f32.gmra.mxu0 %v721
    %v740 = vpop.f32.mrf.mxu0
    %v741 = vadd.f32 %v714, %v740
    %742 = vdwg.mxu0
    %743 = vmatpush.msra.mxu0 0.0
    %744 = vmatpush.msra.mxu0 0.0
    %745 = vmatpush.msra.mxu0 0.0
    %746 = vmatpush.msra.mxu0 0.0
    %747 = vmatpush.msra.mxu0 0.0
    %748 = vmatpush.msra.mxu0 0.0
    %749 = vmatpush.msra.mxu0 0.0
    %750 = vmatpush.msra.mxu0 0.0
    %751 = vmatpush.msra.mxu0 0.0
    %752 = vmatpush.msra.mxu0 0.0
    %753 = vmatpush.msra.mxu0 0.0
    %754 = vmatpush.msra.mxu0 0.0
    %755 = vmatpush.msra.mxu0 %v711
    %756 = vmatpush.msra.mxu0 %v709
    %757 = vmatpush.msra.mxu0 %v707
    %758 = vmatpush.msra.mxu0 %v705
    %759 = vmatmul.f32.gmra.mxu0 %v721
    %v760 = vpop.f32.mrf.mxu0
    %v761 = vadd.f32 %v715, %v760
    %762 = vdwg.mxu0
    %v763 = vmax.f32 %v741, 0.0
    %v764 = vmax.f32 %v761, 0.0
    %v765 = vld [vmem:[%s6] sm:$0x3]
    %v767 = vperm.slane %v765, 0
    %v768 = vperm.slane %v765, 1
    %v771 = vmul.f32 %v763, %v767
    %v772 = vmul.f32 %v764, %v768
    %vm773 = vcmask 179200
    %v774 = vsel %vm773, %v772, 0.0
    %v775 = vadd.f32 %v771, %v774
    %776 = vadd.xlane.f32.xlu0 %v775
    %v777 = vpop.xlane.xlu0 %776
    %v778 = vld [vmem:[#allocation2] sm:$0x1]
    %v780 = vperm.slane %v778, 0
    %v782 = vadd.f32 %v777, %v780
    %v783 = vxor.u32 %v782, 2147483648
    %v784 = vmul.f32 %v783, 1.442695
    %v785 = vpow.pop %v784
    %v786 = vadd.f32 %v785, 1.0
    %v787 = vrcp.pop %v786
    %v788 = vmul.f32 %v786, %v787
    %v789 = vsub.f32 1.0, %v788
    %v790 = vmul.f32 %v787, %v789
    %v791 = vadd.f32 %v787, %v790
    %vm792 = vweird.f32 %v786
    %vm793 = vweird.f32 %v787
    %vm794 = vmor %vm792, %vm793
    %v795 = vsel %vm794, %v787, %v791
    %v796 = vand.u32 2147483647, %v786
    %vm797 = vcmp.eq.f32.partialorder %v796, 8.507059e+37
    %v798 = vand.u32 %v786, 2147483648
    %v799 = vor.u32 1.1754944e-38, %v798
    %v800 = vsel %vm797, %v799, %v795
    %v801 = vmul.f32 1.0, %v800
    %802 = vxpose.xlu0.b32.start [1/16] %v801, 128
    %803 = vxpose.xlu0.b32.cont [2/16] 0.0, 128
    %804 = vxpose.xlu0.b32.cont [3/16] 0.0, 128
    %805 = vxpose.xlu0.b32.cont [4/16] 0.0, 128
    %806 = vxpose.xlu0.b32.cont [5/16] 0.0, 128
    %807 = vxpose.xlu0.b32.cont [6/16] 0.0, 128
    %808 = vxpose.xlu0.b32.cont [7/16] 0.0, 128
    %809 = vxpose.xlu0.b32.cont [8/16] 0.0, 128
    %810 = vxpose.xlu0.b32.cont [9/16] 0.0, 128
    %811 = vxpose.xlu0.b32.cont [10/16] 0.0, 128
    %812 = vxpose.xlu0.b32.cont [11/16] 0.0, 128
    %813 = vxpose.xlu0.b32.cont [12/16] 0.0, 128
    %814 = vxpose.xlu0.b32.cont [13/16] 0.0, 128
    %815 = vxpose.xlu0.b32.cont [14/16] 0.0, 128
    %816 = vxpose.xlu0.b32.cont [15/16] 0.0, 128
    %817 = vxpose.xlu0.b32.end [16/16] 0.0, 128
    %v818 = vpop.trf.xlu0
    %v819 = vpop.trf.xlu0
    %v820 = vpop.trf.xlu0
    %v821 = vpop.trf.xlu0
    %v822 = vpop.trf.xlu0
    %v823 = vpop.trf.xlu0
    %v824 = vpop.trf.xlu0
    %v825 = vpop.trf.xlu0
    %v826 = vpop.trf.xlu0
    %v827 = vpop.trf.xlu0
    %v828 = vpop.trf.xlu0
    %v829 = vpop.trf.xlu0
    %v830 = vpop.trf.xlu0
    %v831 = vpop.trf.xlu0
    %v832 = vpop.trf.xlu0
    %v833 = vpop.trf.xlu0
    %vm834 = vcmask 57344
    %835 = vst.msk [vmem:[#allocation12] sm:$0x1] %vm834, %v818
    // Predicated region
    $region54: #{tpu_custom_call.1} parent=1 // pred_check
      _
    $region55: #{tpu_custom_call.1} parent=1 // pred_check_branch
      %837 = sbr.rel (0) target = $region57
    $region56: #{tpu_custom_call.1} parent=1 // pred_region
      %839 = vsyncadd [#allocation5], 0
      %s841 = sshll.u32 [#allocation12], 4
      %s842 = int_to_ptr.vmem [resolvable:$true] %s841
      %s843 = sshll.u32 %s8, 4
      %s844 = int_to_ptr.hbm [resolvable:$true] %s843
      %846 = dma.vmem_to_hbm [thread:$0]  %s842, 16, %s844, [#allocation5]
    $region57: #{tpu_custom_call.1} parent=1 // pred_fallthru
      _
    // Predicated region
    $region58: #{tpu_custom_call.1} parent=1 // pred_check
      _
    $region59: #{tpu_custom_call.1} parent=1 // pred_check_branch
      %848 = sbr.rel (0) target = $region61
    $region60: #{tpu_custom_call.1} parent=1 // pred_region
      %850 = dma.done [#allocation5], 16
    $region61: #{tpu_custom_call.1} parent=1 // pred_fallthru
      _
    %851 = vsyncpa [#allocation4], 1
    %852 = vsyncpa [#allocation7], 1
    %853 = vsyncpa [#allocation10], 1
    %854 = vsyncpa [#allocation5], 1

</llo_original>
